<compile_context>
chip_gen: v7x
topology: tpu7x:2x2x1
jax: 0.10.0
libtpu: 0.0.40
codegen_flags: <defaults>
</compile_context>

<pallas_src>
import functools

import jax
import jax.numpy as jnp
from jax.experimental import pallas as pl
from jax.experimental.pallas import tpu as pltpu

N_OUT = 5          # fc3 output features
N_OUT_PAD = 128    # lane-dense padded output width


# ----------------------------------------------------------------------------
# Tile selection helpers
# ----------------------------------------------------------------------------
def _largest_divisor_le(n, cap):
    cap = max(1, min(n, cap))
    for d in range(cap, 0, -1):
        if n % d == 0:
            return d
    return 1


def _largest_mult128_divisor_le(hw_pad, cap):
    """Largest multiple of 128 that divides hw_pad (itself a multiple of 128)
    and is <= cap."""
    cap = max(128, min(hw_pad, cap))
    d = (cap // 128) * 128
    while d >= 128:
        if hw_pad % d == 0:
            return d
        d -= 128
    return 128


def _vmem_limit_and_budget():
    """Generation-aware VMEM limit and per-buffer x-block budget."""
    cap = 64 * 1024 * 1024  # conservative default = v7x physical VMEM
    try:
        info = pltpu.get_tpu_info()
        cap = int(getattr(info, "vmem_capacity_bytes", cap) or cap)
    except Exception:
        pass
    # 64 MiB scoped limit on v5e/v6e (128 MiB physical), 32 MiB on v7x (64 MiB).
    vmem_limit = min(cap // 2, 64 * 1024 * 1024)
    # Per-buffer x budget: double-buffering doubles it, weights/out/scratch are tiny.
    block_budget = vmem_limit // 4
    return vmem_limit, block_budget


def _choose_tiles(B, C, HW_pad, itemsize, block_budget_bytes):
    """Grow the spatial tile first (long contiguous DMA runs), then batch."""
    lane_budget = max(128, block_budget_bytes // (itemsize * C))
    hw_target = min(HW_pad, 2048, (lane_budget // 128) * 128)
    hw_t = _largest_mult128_divisor_le(HW_pad, max(128, hw_target))
    bt_budget = max(1, block_budget_bytes // (itemsize * C * hw_t))
    # Keep nb = B // bt >= 2 when B >= 2 so both v7x TensorCores get work.
    bt_cap = min(B, 256, bt_budget, max(1, B // 2))
    bt = _largest_divisor_le(B, bt_cap)
    return bt, hw_t


# ----------------------------------------------------------------------------
# Kernel
# ----------------------------------------------------------------------------
def _experiment_net_kernel(x_ref, w1t_ref, w2t_ref, w3t_ref, b3_ref,
                           o_ref, acc_ref, *, inv_hw):
    """One (batch_tile, hw_tile) grid step.

    x_ref   : (bt, C, hw_t)   native dtype (f32 or bf16)
    w1t_ref : (C, C//r)       f32   (fc1.weight.T, no bias)
    w2t_ref : (C//r, C)       f32   (fc2.weight.T, no bias)
    w3t_ref : (C, 128)        f32   (fc3.weight.T, zero-padded lanes)
    b3_ref  : (1, 128)        f32   (fc3.bias, zero-padded lanes)
    o_ref   : (bt, 128)       f32   (padded output slab; leading grid dim squeezed)
    acc_ref : (bt, C)         f32   spatial-sum accumulator (VMEM scratch)
    """
    hw_idx = pl.program_id(1)

    # globpool: f32 spatial partial sum of the native-dtype tile.
    partial = jnp.sum(x_ref[...].astype(jnp.float32), axis=-1)   # (bt, C)

    @pl.when(hw_idx == 0)
    def _():
        acc_ref[...] = partial            # direct assign: no zero-init pass

    @pl.when(hw_idx > 0)
    def _():
        acc_ref[...] += partial

    @pl.when(hw_idx == pl.num_programs(1) - 1)
    def _():
        pooled = acc_ref[...] * inv_hw                       # mean over true HW

        # fc1 -> relu
        h = jnp.dot(pooled, w1t_ref[...], preferred_element_type=jnp.float32)
        h = jnp.maximum(h, 0.0)                              # (bt, C//r)

        # fc2 -> sigmoid (channel attention gate)
        s = jnp.dot(h, w2t_ref[...], preferred_element_type=jnp.float32)
        s = jax.nn.sigmoid(s)                                # (bt, C)

        # mean(x * s) over HW == pooled * s (s is spatially constant)
        pooled2 = pooled * s

        # fc3 (+bias), lane-dense padded write
        o_ref[...] = (
            jnp.dot(pooled2, w3t_ref[...], preferred_element_type=jnp.float32)
            + b3_ref[...]
        )


# ----------------------------------------------------------------------------
# Wrapper
# ----------------------------------------------------------------------------
def experiment_net_forward(x_nchw, w1, w2, w3, b3, *, batch_tile=None, hw_tile=None):
    """x_nchw: (B, C, H, W) in its native dtype. Weights use PyTorch Linear
    convention: w1: (C//r, C), w2: (C, C//r), w3: (5, C), b3: (5,)."""
    B, C, H, W = x_nchw.shape
    HW = H * W
    Cr = w1.shape[0]

    # Keep x in its native dtype (bf16 stays bf16 -> half the streamed bytes).
    x3 = x_nchw.reshape(B, C, HW)
    # Pad the spatial axis to a multiple of 128 so tiles stay bounded on every
    # generation (zero padding is exact: the kernel sums and inv_hw uses true HW).
    HW_pad = pl.cdiv(HW, 128) * 128
    if HW_pad != HW:
        x3 = jnp.pad(x3, ((0, 0), (0, 0), (0, HW_pad - HW)))

    itemsize = jnp.dtype(x3.dtype).itemsize
    vmem_limit, block_budget = _vmem_limit_and_budget()
    bt_auto, hw_auto = _choose_tiles(B, C, HW_pad, itemsize, block_budget)
    bt = batch_tile if batch_tile is not None else bt_auto
    hw_t = hw_tile if hw_tile is not None else hw_auto
    assert B % bt == 0 and HW_pad % hw_t == 0
    nb, nh = B // bt, HW_pad // hw_t

    w1t = jnp.asarray(w1, jnp.float32).T                               # (C, C//r)
    w2t = jnp.asarray(w2, jnp.float32).T                               # (C//r, C)
    # fc3 weight/bias padded to 128 lanes (zero-filled) for a lane-dense store.
    w3t_pad = jnp.zeros((C, N_OUT_PAD), jnp.float32).at[:, :N_OUT].set(
        jnp.asarray(w3, jnp.float32).T)
    b3_pad = jnp.zeros((1, N_OUT_PAD), jnp.float32).at[0, :N_OUT].set(
        jnp.asarray(b3, jnp.float32))

    kernel = functools.partial(_experiment_net_kernel, inv_hw=1.0 / float(HW))

    cost = pl.CostEstimate(
        flops=2 * B * C * (Cr + C + N_OUT) + B * C * HW_pad,
        transcendentals=B * C,                               # sigmoid
        bytes_accessed=itemsize * B * C * HW_pad
        + 4 * (C * Cr * 2 + C * N_OUT_PAD + N_OUT_PAD + B * N_OUT_PAD),
    )

    # Note: weight blocks (constant index_map) are tiny here; for very large C
    # they could be single-buffered (pipeline_mode=pl.Buffered(1)) to free VMEM
    # for bigger x tiles.
    out_pad = pl.pallas_call(
        kernel,
        out_shape=jax.ShapeDtypeStruct((nb, bt, N_OUT_PAD), jnp.float32),
        grid_spec=pltpu.PrefetchScalarGridSpec(
            num_scalar_prefetch=0,
            grid=(nb, nh),                                   # reduction (HW) axis last
            in_specs=[
                pl.BlockSpec((bt, C, hw_t), lambda b, h: (b, 0, h)),    # x (native dtype)
                pl.BlockSpec((C, Cr),        lambda b, h: (0, 0)),      # w1t
                pl.BlockSpec((Cr, C),        lambda b, h: (0, 0)),      # w2t
                pl.BlockSpec((C, N_OUT_PAD), lambda b, h: (0, 0)),      # w3t (padded)
                pl.BlockSpec((1, N_OUT_PAD), lambda b, h: (0, 0)),      # b3  (padded)
            ],
            # Leading dim squeezed -> kernel sees (bt, 128); last-two block dims
            # always satisfy the tiling rules regardless of bt.
            out_specs=pl.BlockSpec((None, bt, N_OUT_PAD), lambda b, h: (b, 0, 0)),
            scratch_shapes=[pltpu.VMEM((bt, C), jnp.float32)],          # spatial-sum acc
        ),
        compiler_params=pltpu.CompilerParams(
            dimension_semantics=("parallel", "arbitrary"),
            vmem_limit_bytes=int(vmem_limit),
        ),
        cost_estimate=cost,
    )(x3, w1t, w2t, w3t_pad, b3_pad)

    return out_pad.reshape(B, N_OUT_PAD)[:, :N_OUT]


def reference_forward(x, w1, w2, w3, b3):
    """Pure-JAX reference mirroring the PyTorch module."""
    x = x.astype(jnp.float32)
    f = jnp.mean(x, axis=(2, 3))                     # globpool + flatten
    f = jnp.maximum(f @ w1.T, 0.0)                   # fc1 + relu
    f = jax.nn.sigmoid(f @ w2.T)                     # fc2 + sigmoid
    scale = x * f[:, :, None, None]
    f = jnp.mean(scale, axis=(2, 3))                 # avgpool + flatten
    return f @ w3.T + b3                             # fc3


if __name__ == "__main__":
    B, C, H, W, r = 2, 16, 16, 16, 4

    key = jax.random.PRNGKey(0)
    kx, k1, k2, k3, kb = jax.random.split(key, 5)

    x = jax.random.normal(kx, (B, C, H, W), dtype=jnp.float32)
    w1 = jax.random.normal(k1, (C // r, C), dtype=jnp.float32) * 0.1   # fc1.weight
    w2 = jax.random.normal(k2, (C, C // r), dtype=jnp.float32) * 0.1   # fc2.weight
    w3 = jax.random.normal(k3, (5, C), dtype=jnp.float32) * 0.1        # fc3.weight
    b3 = jax.random.normal(kb, (5,), dtype=jnp.float32) * 0.1          # fc3.bias

    ref = reference_forward(x, w1, w2, w3, b3)

    # 1) auto tiling (single spatial step for this size)
    out = jax.block_until_ready(experiment_net_forward(x, w1, w2, w3, b3))
    assert out.shape == (B, 5)
    assert jnp.allclose(out, ref, atol=1e-5, rtol=1e-5), "mismatch (auto tiles)"

    # 2) forced hw_tile=128 exercises the multi-step spatial accumulator path
    out2 = jax.block_until_ready(
        experiment_net_forward(x, w1, w2, w3, b3, hw_tile=128))
    assert jnp.allclose(out2, ref, atol=1e-5, rtol=1e-5), "mismatch (hw_tile=128)"

    # 3) native bf16 input: no f32 upcast in the wrapper, f32 accumulation in-kernel
    x_bf16 = x.astype(jnp.bfloat16)
    out3 = jax.block_until_ready(experiment_net_forward(x_bf16, w1, w2, w3, b3))
    ref3 = reference_forward(x_bf16, w1, w2, w3, b3)
    assert jnp.allclose(out3, ref3, atol=1e-3, rtol=1e-3), "mismatch (bf16 input)"

    # 4) HW not a multiple of 128 -> zero-padded spatial axis path
    x_odd = jax.random.normal(kx, (4, C, 10, 10), dtype=jnp.float32)
    out4 = jax.block_until_ready(experiment_net_forward(x_odd, w1, w2, w3, b3))
    ref4 = reference_forward(x_odd, w1, w2, w3, b3)
    assert out4.shape == (4, 5)
    assert jnp.allclose(out4, ref4, atol=1e-5, rtol=1e-5), "mismatch (padded HW)"

    print("KERNEL_OK")
</pallas_src>

<mosaic_0001>
module attributes {stable_mosaic.version = 11 : i64} {
  func.func @_experiment_net_kernel(%arg0: i32, %arg1: i32, %arg2: memref<1x16x256xf32, #tpu.memory_space<vmem>>, %arg3: memref<16x4xf32, #tpu.memory_space<vmem>>, %arg4: memref<4x16xf32, #tpu.memory_space<vmem>>, %arg5: memref<16x128xf32, #tpu.memory_space<vmem>>, %arg6: memref<1x128xf32, #tpu.memory_space<vmem>>, %arg7: memref<1x1x128xf32, #tpu.memory_space<vmem>>, %arg8: memref<1x16xf32, #tpu.memory_space<vmem>>) attributes {dimension_semantics = [#tpu.dimension_semantics<parallel>, #tpu.dimension_semantics<arbitrary>], iteration_bounds = array<i64: 2, 1>, scalar_prefetch = 0 : i64, scratch_operands = 1 : i64, tpu.core_type = #tpu.core_type<tc>, window_params = [{transform_indices = @transform_0, window_bounds = array<i64: 1, 16, 256>}, {pipeline_mode = #tpu.pipeline_mode<synchronous>, transform_indices = @transform_1, window_bounds = array<i64: 16, 4>}, {pipeline_mode = #tpu.pipeline_mode<synchronous>, transform_indices = @transform_2, window_bounds = array<i64: 4, 16>}, {pipeline_mode = #tpu.pipeline_mode<synchronous>, transform_indices = @transform_3, window_bounds = array<i64: 16, 128>}, {pipeline_mode = #tpu.pipeline_mode<synchronous>, transform_indices = @transform_4, window_bounds = array<i64: 1, 128>}, {transform_indices = @transform_5, window_bounds = array<i64: 1, 1, 128>}]} {
    %c0 = arith.constant 0 : index
    %c0_0 = arith.constant 0 : index
    %c0_1 = arith.constant 0 : index
    %0 = vector.load %arg2[%c0, %c0_0, %c0_1] : memref<1x16x256xf32, #tpu.memory_space<vmem>>, vector<1x16x256xf32>
    %cst = arith.constant dense<0.000000e+00> : vector<1x16xf32>
    %1 = vector.multi_reduction <add>, %0, %cst [2] : vector<1x16x256xf32> to vector<1x16xf32>
    %c0_i32 = arith.constant 0 : i32
    %2 = arith.cmpi eq, %arg1, %c0_i32 : i32
    %3 = arith.extui %2 : i1 to i32
    %c0_i32_2 = arith.constant 0 : i32
    %4 = arith.cmpi ne, %3, %c0_i32_2 : i32
    scf.if %4 {
      %c0_7 = arith.constant 0 : index
      %c0_8 = arith.constant 0 : index
      %11 = vector.load %arg8[%c0_7, %c0_8] : memref<1x16xf32, #tpu.memory_space<vmem>>, vector<1x16xf32>
      tpu.vector_store %arg8[%c0_7, %c0_8], %1 {strides = array<i32>} : memref<1x16xf32, #tpu.memory_space<vmem>>, vector<1x16xf32>,
    } else {
    }
    %c0_i32_3 = arith.constant 0 : i32
    %5 = arith.cmpi sgt, %arg1, %c0_i32_3 : i32
    %6 = arith.extui %5 : i1 to i32
    %c0_i32_4 = arith.constant 0 : i32
    %7 = arith.cmpi ne, %6, %c0_i32_4 : i32
    scf.if %7 {
      %c0_7 = arith.constant 0 : index
      %c0_8 = arith.constant 0 : index
      %11 = vector.load %arg8[%c0_7, %c0_8] : memref<1x16xf32, #tpu.memory_space<vmem>>, vector<1x16xf32>
      %12 = arith.addf %11, %1 : vector<1x16xf32>
      %c0_9 = arith.constant 0 : index
      %c0_10 = arith.constant 0 : index
      %13 = vector.load %arg8[%c0_9, %c0_10] : memref<1x16xf32, #tpu.memory_space<vmem>>, vector<1x16xf32>
      tpu.vector_store %arg8[%c0_9, %c0_10], %12 {strides = array<i32>} : memref<1x16xf32, #tpu.memory_space<vmem>>, vector<1x16xf32>,
    } else {
    }
    %c0_i32_5 = arith.constant 0 : i32
    %8 = arith.cmpi eq, %arg1, %c0_i32_5 : i32
    %9 = arith.extui %8 : i1 to i32
    %c0_i32_6 = arith.constant 0 : i32
    %10 = arith.cmpi ne, %9, %c0_i32_6 : i32
    scf.if %10 {
      %c0_7 = arith.constant 0 : index
      %c0_8 = arith.constant 0 : index
      %11 = vector.load %arg8[%c0_7, %c0_8] : memref<1x16xf32, #tpu.memory_space<vmem>>, vector<1x16xf32>
      %cst_9 = arith.constant 3.906250e-03 : f32
      %12 = vector.broadcast %cst_9 : f32 to vector<1x16xf32>
      %13 = arith.mulf %11, %12 : vector<1x16xf32>
      %c0_10 = arith.constant 0 : index
      %c0_11 = arith.constant 0 : index
      %14 = vector.load %arg3[%c0_10, %c0_11] : memref<16x4xf32, #tpu.memory_space<vmem>>, vector<16x4xf32>
      %cst_12 = arith.constant dense<0.000000e+00> : vector<1x4xf32>
      %15 = tpu.matmul %13, %14, %cst_12 {dimension_numbers = #tpu.dot_dimension_numbers<[1], [0], [0], [1], [0, 0, 1, 1], [], []>} : vector<1x16xf32>, vector<16x4xf32>, vector<1x4xf32> -> vector<1x4xf32>
      %cst_13 = arith.constant 0.000000e+00 : f32
      %16 = vector.broadcast %cst_13 : f32 to vector<1x4xf32>
      %17 = arith.maximumf %15, %16 : vector<1x4xf32>
      %c0_14 = arith.constant 0 : index
      %c0_15 = arith.constant 0 : index
      %18 = vector.load %arg4[%c0_14, %c0_15] : memref<4x16xf32, #tpu.memory_space<vmem>>, vector<4x16xf32>
      %cst_16 = arith.constant dense<0.000000e+00> : vector<1x16xf32>
      %19 = tpu.matmul %17, %18, %cst_16 {dimension_numbers = #tpu.dot_dimension_numbers<[1], [0], [0], [1], [0, 0, 1, 1], [], []>} : vector<1x4xf32>, vector<4x16xf32>, vector<1x16xf32> -> vector<1x16xf32>
      %20 = arith.negf %19 : vector<1x16xf32>
      %21 = math.exp %20 : vector<1x16xf32>
      %cst_17 = arith.constant 1.000000e+00 : f32
      %22 = vector.broadcast %cst_17 : f32 to vector<1x16xf32>
      %23 = arith.addf %22, %21 : vector<1x16xf32>
      %24 = arith.divf %22, %23 : vector<1x16xf32>
      %25 = arith.mulf %13, %24 : vector<1x16xf32>
      %c0_18 = arith.constant 0 : index
      %c0_19 = arith.constant 0 : index
      %26 = vector.load %arg5[%c0_18, %c0_19] : memref<16x128xf32, #tpu.memory_space<vmem>>, vector<16x128xf32>
      %cst_20 = arith.constant dense<0.000000e+00> : vector<1x128xf32>
      %27 = tpu.matmul %25, %26, %cst_20 {dimension_numbers = #tpu.dot_dimension_numbers<[1], [0], [0], [1], [0, 0, 1, 1], [], []>} : vector<1x16xf32>, vector<16x128xf32>, vector<1x128xf32> -> vector<1x128xf32>
      %c0_21 = arith.constant 0 : index
      %c0_22 = arith.constant 0 : index
      %28 = vector.load %arg6[%c0_21, %c0_22] : memref<1x128xf32, #tpu.memory_space<vmem>>, vector<1x128xf32>
      %29 = arith.addf %27, %28 : vector<1x128xf32>
      %c0_23 = arith.constant 0 : index
      %c0_24 = arith.constant 0 : index
      %c0_25 = arith.constant 0 : index
      %30 = vector.load %arg7[%c0_23, %c0_24, %c0_25] : memref<1x1x128xf32, #tpu.memory_space<vmem>>, vector<1x1x128xf32>
      %31 = vector.shape_cast %30 : vector<1x1x128xf32> to vector<1x128xf32>
      %32 = vector.shape_cast %29 : vector<1x128xf32> to vector<1x1x128xf32>
      tpu.vector_store %arg7[%c0_23, %c0_24, %c0_25], %32 {strides = array<i32>} : memref<1x1x128xf32, #tpu.memory_space<vmem>>, vector<1x1x128xf32>,
    } else {
    }
    return
  }
  func.func @transform_0(%arg0: i32, %arg1: i32) -> (i32, i32, i32) {
    %c0_i32 = arith.constant 0 : i32
    %c0_i32_0 = arith.constant 0 : i32
    return %arg0, %c0_i32, %arg1 : i32, i32, i32
  }
  func.func @transform_1(%arg0: i32, %arg1: i32) -> (i32, i32) {
    %c0_i32 = arith.constant 0 : i32
    %c0_i32_0 = arith.constant 0 : i32
    %c0_i32_1 = arith.constant 0 : i32
    return %c0_i32, %c0_i32_0 : i32, i32
  }
  func.func @transform_2(%arg0: i32, %arg1: i32) -> (i32, i32) {
    %c0_i32 = arith.constant 0 : i32
    %c0_i32_0 = arith.constant 0 : i32
    %c0_i32_1 = arith.constant 0 : i32
    return %c0_i32, %c0_i32_0 : i32, i32
  }
  func.func @transform_3(%arg0: i32, %arg1: i32) -> (i32, i32) {
    %c0_i32 = arith.constant 0 : i32
    %c0_i32_0 = arith.constant 0 : i32
    %c0_i32_1 = arith.constant 0 : i32
    return %c0_i32, %c0_i32_0 : i32, i32
  }
  func.func @transform_4(%arg0: i32, %arg1: i32) -> (i32, i32) {
    %c0_i32 = arith.constant 0 : i32
    %c0_i32_0 = arith.constant 0 : i32
    %c0_i32_1 = arith.constant 0 : i32
    return %c0_i32, %c0_i32_0 : i32, i32
  }
  func.func @transform_5(%arg0: i32, %arg1: i32) -> (i32, i32, i32) {
    %c0_i32 = arith.constant 0 : i32
    %c0_i32_0 = arith.constant 0 : i32
    %c0_i32_1 = arith.constant 0 : i32
    return %arg0, %c0_i32, %c0_i32_0 : i32, i32, i32
  }
}

</mosaic_0001>

<llo_original>
// kernel: tpu_custom_call.1
$region0: #{tpu_custom_call.1}
  #allocation0 [shape = 'u32[]', space=smem, size = 0x4, offset = 0x4, fixed_abs, tag = 'smem constant byte address 0x4 - core index']
  #allocation1 [shape = 'u32[144,128]{1,0:T(1,128)}', space=vmem, size = 0x12000, scoped, tag = 'internal scratch']
  #allocation2 [shape = 'f32[1,16]{1,0:T(1,128)}', space=vmem, size = 0x200, scoped, tag = 'scratch operand']
  %s0 = inlined_call_operand.hbm [shape: f32[2,16,256], index: 0, kind: input, shape index: {}]
  %s1 = inlined_call_operand.vmem [shape: f32[16,4], index: 1, kind: input, shape index: {}]
  %s2 = inlined_call_operand.vmem [shape: f32[4,16], index: 2, kind: input, shape index: {}]
  %s3 = inlined_call_operand.vmem [shape: f32[16,128], index: 3, kind: input, shape index: {}]
  %s4 = inlined_call_operand.vmem [shape: f32[1,128], index: 4, kind: input, shape index: {}]
  %s5 = inlined_call_operand.hbm [shape: f32[2,1,128], index: 5, kind: output, shape index: {}]
  %s6 = sld [smem:[#allocation0]]
  $region69: #{tpu_custom_call.1} parent=0
    _
  %s8 = ssub.s32 1, %s6
  %s9 = scalar_select 0, %s8, %s6
  $region1: #{tpu_custom_call.1} parent=0
    #allocation3 [shape = 'u8[32768]{0}', space=vmem, size = 0x8000, scoped, tag = 'input window, operand 0']
    #allocation4 [shape = 's32[2]{0}', space=sflag, size = 0x8, scoped, tag = 'scoped memory for tpu_custom_call.1']
    #allocation5 [shape = 's32[2]{0}', space=sflag, size = 0x8, scoped, tag = 'scoped memory for tpu_custom_call.1']
    #allocation6 [shape = 'u8[1024]{0}', space=vmem, size = 0x400, scoped, tag = 'output window, operand 0']
    %10 = vsyncpa [#allocation4], 0
    %s11 = scalar_lea.sflag [#allocation4], 1
    %12 = vsyncpa %s11, 0
    %13 = vsyncpa [#allocation5], 0
    %s14 = scalar_lea.sflag [#allocation5], 1
    %15 = vsyncpa %s14, 0
    loop: start=0, step=1, limit=4
    $region2: #{tpu_custom_call.1} parent=1 // loop_pre_header
      _
    $region3: #{tpu_custom_call.1} parent=1 // loop_header
      %s17 = sphi 0, %s21
      %p18 = scmp.ge.s32.totalorder %s17, 4
      %s24 = sphi 0, %s36
      %s25 = sphi 0, %s32
      %s26 = sphi 0, %s24
      %s27 = sphi 0, %s25
      %s28 = sphi 0, %s26
      %s29 = sphi 0, %s27
      %s41 = sphi 0, %s43
      %s44 = sphi 0, %s41
      %s45 = sphi 0, %s44
      %s61 = sphi 0, %s45
      %s65 = sphi 0, %s65
      %s67 = sphi 0, %s65
      %s68 = sphi 0, %s67
      %s82 = sphi 0, %s68
      %s86 = sphi 0, %s86
      %s88 = sphi 0, %s86
      %s89 = sphi 0, %s88
      %s103 = sphi 0, %s89
      %s107 = sphi 0, %s107
      %s109 = sphi 0, %s107
      %s110 = sphi 0, %s109
      %s124 = sphi 0, %s110
      %s128 = sphi 0, %s128
      %s130 = sphi 0, %s128
      %s131 = sphi 0, %s130
      %s145 = sphi 0, %s131
      %s151 = sphi 0, %s153
      %s154 = sphi 0, %s151
      %s155 = sphi 0, %s154
      %s171 = sphi 0, %s155
    $region4: #{tpu_custom_call.1} parent=1 // loop_header_branch
      %20 = sbr.rel (%p18) target = $region8
    $region5: #{tpu_custom_call.1} parent=1 // loop_body
      %s22 = ssub.s32 %s17, 1
      %s23 = ssub.s32 %s17, 2
      %s30 = sadd.s32 1, %s25
      %p31 = scmp.ge.s32.totalorder %s30, 1
      %s32 = scalar_select %p31, 0, %s30
      %s33 = sadd.s32 1, %s24
      %s34 = scalar_select %p31, %s33, %s24
      %p35 = scmp.ge.s32.totalorder %s34, 2
      %s36 = scalar_select %p35, 0, %s34
      %s37 = ssub.s32 %s24, %s36
      %s38 = ssub.s32 %s25, %s32
      %s39 = sor.u32 %s37, %s38
      %p40 = scmp.eq.s32.totalorder %s39, 0
      %s42 = sadd.s32 %s41, 1
      %s43 = scalar_select %p40, %s41, %s42
      %p46 = pneg %p40
      %p47 = scmp.eq.s32.totalorder %s17, 1
      %p48 = por %p46, %p47
      %p49 = scmp.ne.s32.totalorder %s41, %s44
      %p50 = scmp.eq.s32.totalorder %s17, 0
      %p51 = por %p49, %p50
      %p52 = scmp.ne.s32.totalorder %s41, %s44
      %p53 = scmp.eq.s32.totalorder %s22, 1
      %p54 = por %p52, %p53
      %p55 = scmp.ne.s32.totalorder %s44, %s45
      %p56 = scmp.eq.s32.totalorder %s22, 0
      %p57 = por %p55, %p56
      %p58 = scmp.ne.s32.totalorder %s44, %s45
      %p59 = scmp.eq.s32.totalorder %s23, 1
      %p60 = por %p58, %p59
      %p62 = scmp.ne.s32.totalorder %s45, %s61
      %p63 = scmp.eq.s32.totalorder %s23, 0
      %p64 = por %p62, %p63
      %s66 = sadd.s32 %s65, 1
      %p69 = scmp.eq.s32.totalorder %s17, 1
      %p70 = scmp.ne.s32.totalorder %s65, %s67
      %p71 = scmp.eq.s32.totalorder %s17, 0
      %p72 = por %p70, %p71
      %p73 = scmp.ne.s32.totalorder %s65, %s67
      %p74 = scmp.eq.s32.totalorder %s22, 1
      %p75 = por %p73, %p74
      %p76 = scmp.ne.s32.totalorder %s67, %s68
      %p77 = scmp.eq.s32.totalorder %s22, 0
      %p78 = por %p76, %p77
      %p79 = scmp.ne.s32.totalorder %s67, %s68
      %p80 = scmp.eq.s32.totalorder %s23, 1
      %p81 = por %p79, %p80
      %p83 = scmp.ne.s32.totalorder %s68, %s82
      %p84 = scmp.eq.s32.totalorder %s23, 0
      %p85 = por %p83, %p84
      %s87 = sadd.s32 %s86, 1
      %p90 = scmp.eq.s32.totalorder %s17, 1
      %p91 = scmp.ne.s32.totalorder %s86, %s88
      %p92 = scmp.eq.s32.totalorder %s17, 0
      %p93 = por %p91, %p92
      %p94 = scmp.ne.s32.totalorder %s86, %s88
      %p95 = scmp.eq.s32.totalorder %s22, 1
      %p96 = por %p94, %p95
      %p97 = scmp.ne.s32.totalorder %s88, %s89
      %p98 = scmp.eq.s32.totalorder %s22, 0
      %p99 = por %p97, %p98
      %p100 = scmp.ne.s32.totalorder %s88, %s89
      %p101 = scmp.eq.s32.totalorder %s23, 1
      %p102 = por %p100, %p101
      %p104 = scmp.ne.s32.totalorder %s89, %s103
      %p105 = scmp.eq.s32.totalorder %s23, 0
      %p106 = por %p104, %p105
      %s108 = sadd.s32 %s107, 1
      %p111 = scmp.eq.s32.totalorder %s17, 1
      %p112 = scmp.ne.s32.totalorder %s107, %s109
      %p113 = scmp.eq.s32.totalorder %s17, 0
      %p114 = por %p112, %p113
      %p115 = scmp.ne.s32.totalorder %s107, %s109
      %p116 = scmp.eq.s32.totalorder %s22, 1
      %p117 = por %p115, %p116
      %p118 = scmp.ne.s32.totalorder %s109, %s110
      %p119 = scmp.eq.s32.totalorder %s22, 0
      %p120 = por %p118, %p119
      %p121 = scmp.ne.s32.totalorder %s109, %s110
      %p122 = scmp.eq.s32.totalorder %s23, 1
      %p123 = por %p121, %p122
      %p125 = scmp.ne.s32.totalorder %s110, %s124
      %p126 = scmp.eq.s32.totalorder %s23, 0
      %p127 = por %p125, %p126
      %s129 = sadd.s32 %s128, 1
      %p132 = scmp.eq.s32.totalorder %s17, 1
      %p133 = scmp.ne.s32.totalorder %s128, %s130
      %p134 = scmp.eq.s32.totalorder %s17, 0
      %p135 = por %p133, %p134
      %p136 = scmp.ne.s32.totalorder %s128, %s130
      %p137 = scmp.eq.s32.totalorder %s22, 1
      %p138 = por %p136, %p137
      %p139 = scmp.ne.s32.totalorder %s130, %s131
      %p140 = scmp.eq.s32.totalorder %s22, 0
      %p141 = por %p139, %p140
      %p142 = scmp.ne.s32.totalorder %s130, %s131
      %p143 = scmp.eq.s32.totalorder %s23, 1
      %p144 = por %p142, %p143
      %p146 = scmp.ne.s32.totalorder %s131, %s145
      %p147 = scmp.eq.s32.totalorder %s23, 0
      %p148 = por %p146, %p147
      %s149 = ssub.s32 %s24, %s36
      %p150 = scmp.eq.s32.totalorder %s149, 0
      %s152 = sadd.s32 %s151, 1
      %s153 = scalar_select %p150, %s151, %s152
      %p156 = pneg %p150
      %p157 = scmp.eq.s32.totalorder %s17, 1
      %p158 = por %p156, %p157
      %p159 = scmp.ne.s32.totalorder %s151, %s154
      %p160 = scmp.eq.s32.totalorder %s17, 0
      %p161 = por %p159, %p160
      %p162 = scmp.ne.s32.totalorder %s151, %s154
      %p163 = scmp.eq.s32.totalorder %s22, 1
      %p164 = por %p162, %p163
      %p165 = scmp.ne.s32.totalorder %s154, %s155
      %p166 = scmp.eq.s32.totalorder %s22, 0
      %p167 = por %p165, %p166
      %p168 = scmp.ne.s32.totalorder %s154, %s155
      %p169 = scmp.eq.s32.totalorder %s23, 1
      %p170 = por %p168, %p169
      %p172 = scmp.ne.s32.totalorder %s155, %s171
      %p173 = scmp.eq.s32.totalorder %s23, 0
      %p174 = por %p172, %p173
      %p175 = scmp.le.s32.totalorder 1, %s17
      %p176 = scmp.lt.s32.totalorder %s17, 3
      %p177 = pnand %p175, %p176
      %p178 = pneg %p177
      // Predicated region
      $region9: #{tpu_custom_call.1} parent=5 // pred_check
        _
      $region10: #{tpu_custom_call.1} parent=5 // pred_check_branch
        %180 = sbr.rel (%p177) target = $region12
      $region11: #{tpu_custom_call.1} parent=5 // pred_region
        %s181 = ssub.s32 %s17, 1
        // Predicated region
        $region13: #{tpu_custom_call.1} parent=11 // pred_check
          %p182 = pneg %p78
        $region14: #{tpu_custom_call.1} parent=11 // pred_check_branch
          %184 = sbr.rel (%p182) target = $region16
        $region15: #{tpu_custom_call.1} parent=11 // pred_region
          _
        $region16: #{tpu_custom_call.1} parent=11 // pred_fallthru
          _
        // Predicated region
        $region17: #{tpu_custom_call.1} parent=11 // pred_check
          %p185 = pneg %p99
        $region18: #{tpu_custom_call.1} parent=11 // pred_check_branch
          %187 = sbr.rel (%p185) target = $region20
        $region19: #{tpu_custom_call.1} parent=11 // pred_region
          _
        $region20: #{tpu_custom_call.1} parent=11 // pred_fallthru
          _
        // Predicated region
        $region21: #{tpu_custom_call.1} parent=11 // pred_check
          %p188 = pneg %p120
        $region22: #{tpu_custom_call.1} parent=11 // pred_check_branch
          %190 = sbr.rel (%p188) target = $region24
        $region23: #{tpu_custom_call.1} parent=11 // pred_region
          _
        $region24: #{tpu_custom_call.1} parent=11 // pred_fallthru
          _
        // Predicated region
        $region25: #{tpu_custom_call.1} parent=11 // pred_check
          %p191 = pneg %p141
        $region26: #{tpu_custom_call.1} parent=11 // pred_check_branch
          %193 = sbr.rel (%p191) target = $region28
        $region27: #{tpu_custom_call.1} parent=11 // pred_region
          _
        $region28: #{tpu_custom_call.1} parent=11 // pred_fallthru
          _
      $region12: #{tpu_custom_call.1} parent=5 // pred_fallthru
        _
      %p194 = scmp.lt.s32.totalorder %s17, 2
      // Predicated region
      $region29: #{tpu_custom_call.1} parent=5 // pred_check
        %p195 = pneg %p194
      $region30: #{tpu_custom_call.1} parent=5 // pred_check_branch
        %197 = sbr.rel (%p195) target = $region32
      $region31: #{tpu_custom_call.1} parent=5 // pred_region
        // Predicated region
        $region33: #{tpu_custom_call.1} parent=31 // pred_check
          %p198 = pneg %p51
        $region34: #{tpu_custom_call.1} parent=31 // pred_check_branch
          %200 = sbr.rel (%p198) target = $region36
        $region35: #{tpu_custom_call.1} parent=31 // pred_region
          %s201 = sand.u32 %s41, 1
          %s202 = scalar_lea.sflag [#allocation4], %s201
          %s203 = sand.u32 %s41, 1
          %s204 = smul.addr %s203, 32
          %s205 = scalar_lea.vmem [#allocation3], %s204
          %s206 = smul.u32 2, %s25
          %s208 = ssub.s32 512, 512
          %209 = vsyncadd %s202, %s208
          %s210 = smul.addr %s24, 4
          %s211 = sadd.s32 %s206, %s210
          %s212 = smul.addr %s211, 128
          %s213 = scalar_lea.hbm %s0, %s212
          %s214 = sshll.u32 %s205, 4
          %s215 = int_to_ptr.vmem [resolvable:$true] %s214
          %220 = dma.hbm_to_vmem [thread:$0]  %s213, 512, %s215, %s202, 256, 256, 16
        $region36: #{tpu_custom_call.1} parent=31 // pred_fallthru
          _
      $region32: #{tpu_custom_call.1} parent=5 // pred_fallthru
        _
      %p221 = scmp.le.s32.totalorder 1, %s17
      %p222 = scmp.lt.s32.totalorder %s17, 3
      %p223 = pnand %p221, %p222
      %p224 = pneg %p223
      // Predicated region
      $region37: #{tpu_custom_call.1} parent=5 // pred_check
        _
      $region38: #{tpu_custom_call.1} parent=5 // pred_check_branch
        %226 = sbr.rel (%p223) target = $region40
      $region39: #{tpu_custom_call.1} parent=5 // pred_region
        %s227 = ssub.s32 %s17, 1
        %s228 = sand.u32 %s44, 1
        %s229 = scalar_lea.sflag [#allocation4], %s228
        %s230 = sand.u32 %s44, 1
        %s231 = smul.addr %s230, 32
        %s232 = scalar_lea.vmem [#allocation3], %s231
        // Predicated region
        $region41: #{tpu_custom_call.1} parent=39 // pred_check
          %p233 = pneg %p57
        $region42: #{tpu_custom_call.1} parent=39 // pred_check_branch
          %235 = sbr.rel (%p233) target = $region44
        $region43: #{tpu_custom_call.1} parent=39 // pred_region
          %236 = dma.done %s229, 512
        $region44: #{tpu_custom_call.1} parent=39 // pred_fallthru
          _
        %s237 = sand.u32 %s44, 1
        %s238 = scalar_lea.sflag [#allocation4], %s237
        %s239 = sand.u32 %s44, 1
        %s240 = smul.addr %s239, 32
        %s241 = scalar_lea.vmem [#allocation3], %s240
        %p242 = pneg %p57
        %p243 = pneg %p54
        %p244 = pneg %p78
        %p245 = pneg %p75
        %p246 = pneg %p99
        %p247 = pneg %p96
        %p248 = pneg %p120
        %p249 = pneg %p117
        %p250 = pneg %p141
        %p251 = pneg %p138
        %p252 = pneg %p167
        %p253 = pneg %p164
        %s254 = sand.u32 %s154, 1
        %s255 = scalar_lea.sflag [#allocation5], %s254
        %s256 = sand.u32 %s154, 1
        %s257 = scalar_lea.vmem [#allocation6], %s256
        %s258 = smul.u32 2, %s27
        %v259 = vld [vmem:[%s232] sm:$0xff]
        %v260 = vld [vmem:[%s232 + $0x8] sm:$0xff]
        %v261 = vld [vmem:[%s232 + $0x10] sm:$0xff]
        %v262 = vld [vmem:[%s232 + $0x18] sm:$0xff]
        %v263 = vadd.f32 %v259, %v260
        %264 = vadd.xlane.f32.xlu0 %v263
        %v265 = vpop.xlane.xlu0 %264
        %v266 = vadd.f32 %v261, %v262
        %267 = vadd.xlane.f32.xlu0 %v266
        %v268 = vpop.xlane.xlu0 %267
        %p269 = scmp.eq.s32.totalorder %s27, 0
        // Predicated region
        $region45: #{tpu_custom_call.1} parent=39 // pred_check
          %p270 = pneg %p269
        $region46: #{tpu_custom_call.1} parent=39 // pred_check_branch
          %272 = sbr.rel (%p270) target = $region48
        $region47: #{tpu_custom_call.1} parent=39 // pred_region
          %v275 = vlaneseq
          %v276 = vand.u32 %v275, 127
          %v277 = vlaneseq
          %v278 = vshrl.u32 %v277, 7
          %v279 = vsub.s32 %v276, %v278
          %v280 = vrot.slane %v265, %v279
          %v281 = vadd.s32 %v276, 4294967288
          %v282 = vlaneseq
          %v283 = vshrl.u32 %v282, 7
          %v284 = vsub.s32 %v281, %v283
          %v285 = vrot.slane %v268, %v284
          %vm286 = vcmask 130112
          %v287 = vsel %vm286, %v285, %v280
          %vm289 = vcmask 122880
          %290 = vst.msk [vmem:[#allocation2] sm:$0x1] %vm289, %v287
        $region48: #{tpu_custom_call.1} parent=39 // pred_fallthru
          _
        %p291 = scmp.gt.s32.totalorder %s27, 0
        // Predicated region
        $region49: #{tpu_custom_call.1} parent=39 // pred_check
          %p292 = pneg %p291
        $region50: #{tpu_custom_call.1} parent=39 // pred_check_branch
          %294 = sbr.rel (%p292) target = $region52
        $region51: #{tpu_custom_call.1} parent=39 // pred_region
          %v295 = vld [vmem:[#allocation2] sm:$0x1]
          %v298 = vlaneseq
          %v299 = vshrl.u32 %v298, 7
          %v300 = vsub.s32 0, %v299
          %v301 = vrot.slane %v265, %v300
          %v302 = vlaneseq
          %v303 = vshrl.u32 %v302, 7
          %v304 = vsub.s32 1, %v303
          %v305 = vrot.slane %v265, %v304
          %v306 = vlaneseq
          %v307 = vshrl.u32 %v306, 7
          %v308 = vsub.s32 2, %v307
          %v309 = vrot.slane %v265, %v308
          %v310 = vlaneseq
          %v311 = vshrl.u32 %v310, 7
          %v312 = vsub.s32 3, %v311
          %v313 = vrot.slane %v265, %v312
          %v314 = vlaneseq
          %v315 = vshrl.u32 %v314, 7
          %v316 = vsub.s32 4, %v315
          %v317 = vrot.slane %v265, %v316
          %v318 = vlaneseq
          %v319 = vshrl.u32 %v318, 7
          %v320 = vsub.s32 5, %v319
          %v321 = vrot.slane %v265, %v320
          %v322 = vlaneseq
          %v323 = vshrl.u32 %v322, 7
          %v324 = vsub.s32 6, %v323
          %v325 = vrot.slane %v265, %v324
          %v326 = vlaneseq
          %v327 = vshrl.u32 %v326, 7
          %v328 = vsub.s32 7, %v327
          %v329 = vrot.slane %v265, %v328
          %v330 = vlaneseq
          %v331 = vshrl.u32 %v330, 7
          %v332 = vsub.s32 0, %v331
          %v333 = vrot.slane %v268, %v332
          %v334 = vlaneseq
          %v335 = vshrl.u32 %v334, 7
          %v336 = vsub.s32 1, %v335
          %v337 = vrot.slane %v268, %v336
          %v338 = vlaneseq
          %v339 = vshrl.u32 %v338, 7
          %v340 = vsub.s32 2, %v339
          %v341 = vrot.slane %v268, %v340
          %v342 = vlaneseq
          %v343 = vshrl.u32 %v342, 7
          %v344 = vsub.s32 3, %v343
          %v345 = vrot.slane %v268, %v344
          %v346 = vlaneseq
          %v347 = vshrl.u32 %v346, 7
          %v348 = vsub.s32 4, %v347
          %v349 = vrot.slane %v268, %v348
          %v350 = vlaneseq
          %v351 = vshrl.u32 %v350, 7
          %v352 = vsub.s32 5, %v351
          %v353 = vrot.slane %v268, %v352
          %v354 = vlaneseq
          %v355 = vshrl.u32 %v354, 7
          %v356 = vsub.s32 6, %v355
          %v357 = vrot.slane %v268, %v356
          %v358 = vlaneseq
          %v359 = vshrl.u32 %v358, 7
          %v360 = vsub.s32 7, %v359
          %v361 = vrot.slane %v268, %v360
          %v362 = vcombine.low %v301, %v305
          %v363 = vcombine.low %v309, %v313
          %v364 = vcombine.low %v317, %v321
          %v365 = vcombine.low %v325, %v329
          %v367 = vunpack.c.l.s4 1966171168
          %v368 = vunpack.c.0.s8 %v367
          %v369 = vlaneseq
          %v370 = vshrl.u32 %v369, 7
          %v371 = vsub.s32 %v368, %v370
          %v372 = vrot.slane %v362, %v371
          %v374 = vunpack.c.l.s4 1966171168
          %v375 = vunpack.c.0.s8 %v374
          %v376 = vlaneseq
          %v377 = vshrl.u32 %v376, 7
          %v378 = vsub.s32 %v375, %v377
          %v379 = vrot.slane %v363, %v378
          %v381 = vunpack.c.l.s4 1966171168
          %v382 = vunpack.c.0.s8 %v381
          %v383 = vlaneseq
          %v384 = vshrl.u32 %v383, 7
          %v385 = vsub.s32 %v382, %v384
          %v386 = vrot.slane %v364, %v385
          %v388 = vunpack.c.l.s4 1966171168
          %v389 = vunpack.c.0.s8 %v388
          %v390 = vlaneseq
          %v391 = vshrl.u32 %v390, 7
          %v392 = vsub.s32 %v389, %v391
          %v393 = vrot.slane %v365, %v392
          %v394 = vcombine.low %v372, %v379
          %v395 = vcombine.low %v386, %v393
          %v397 = vunpack.c.l.s4 1966171168
          %v398 = vunpack.c.0.s8 %v397
          %v399 = vlaneseq
          %v400 = vshrl.u32 %v399, 7
          %v401 = vsub.s32 %v398, %v400
          %v402 = vrot.slane %v394, %v401
          %v404 = vunpack.c.l.s4 1966171168
          %v405 = vunpack.c.0.s8 %v404
          %v406 = vlaneseq
          %v407 = vshrl.u32 %v406, 7
          %v408 = vsub.s32 %v405, %v407
          %v409 = vrot.slane %v395, %v408
          %v410 = vcombine.low %v402, %v409
          %v411 = vcombine.low %v333, %v337
          %v412 = vcombine.low %v341, %v345
          %v413 = vcombine.low %v349, %v353
          %v414 = vcombine.low %v357, %v361
          %v416 = vunpack.c.l.s4 1966171168
          %v417 = vunpack.c.0.s8 %v416
          %v418 = vlaneseq
          %v419 = vshrl.u32 %v418, 7
          %v420 = vsub.s32 %v417, %v419
          %v421 = vrot.slane %v411, %v420
          %v423 = vunpack.c.l.s4 1966171168
          %v424 = vunpack.c.0.s8 %v423
          %v425 = vlaneseq
          %v426 = vshrl.u32 %v425, 7
          %v427 = vsub.s32 %v424, %v426
          %v428 = vrot.slane %v412, %v427
          %v430 = vunpack.c.l.s4 1966171168
          %v431 = vunpack.c.0.s8 %v430
          %v432 = vlaneseq
          %v433 = vshrl.u32 %v432, 7
          %v434 = vsub.s32 %v431, %v433
          %v435 = vrot.slane %v413, %v434
          %v437 = vunpack.c.l.s4 1966171168
          %v438 = vunpack.c.0.s8 %v437
          %v439 = vlaneseq
          %v440 = vshrl.u32 %v439, 7
          %v441 = vsub.s32 %v438, %v440
          %v442 = vrot.slane %v414, %v441
          %v443 = vcombine.low %v421, %v428
          %v444 = vcombine.low %v435, %v442
          %v446 = vunpack.c.l.s4 1966171168
          %v447 = vunpack.c.0.s8 %v446
          %v448 = vlaneseq
          %v449 = vshrl.u32 %v448, 7
          %v450 = vsub.s32 %v447, %v449
          %v451 = vrot.slane %v443, %v450
          %v453 = vunpack.c.l.s4 1966171168
          %v454 = vunpack.c.0.s8 %v453
          %v455 = vlaneseq
          %v456 = vshrl.u32 %v455, 7
          %v457 = vsub.s32 %v454, %v456
          %v458 = vrot.slane %v444, %v457
          %v459 = vcombine.low %v451, %v458
          %460 = vset.pattern.permute.xlu0 0
          %461 = vperm.xlu0 %460, %v410
          %v462 = vpop.permute.xlu0 %461
          %463 = vset.pattern.permute.xlu0 0
          %464 = vperm.xlu0 %463, %v459
          %v465 = vpop.permute.xlu0 %464
          %v466 = vlaneseq
          %v467 = vand.u32 %v466, 127
          %v468 = vlaneseq
          %v469 = vshrl.u32 %v468, 7
          %v470 = vsub.s32 %v467, %v469
          %v471 = vrot.slane %v462, %v470
          %v472 = vadd.s32 %v467, 4294967288
          %v473 = vlaneseq
          %v474 = vshrl.u32 %v473, 7
          %v475 = vsub.s32 %v472, %v474
          %v476 = vrot.slane %v465, %v475
          %vm477 = vcmask 130112
          %v478 = vsel %vm477, %v476, %v471
          %v480 = vunpack.c.l.s4 1966171168
          %v481 = vunpack.c.0.s8 %v480
          %v482 = vlaneseq
          %v483 = vshrl.u32 %v482, 7
          %v484 = vsub.s32 %v481, %v483
          %v485 = vrot.slane %v478, %v484
          %v487 = vunpack.c.l.s4 1966171168
          %v488 = vunpack.c.0.s8 %v487
          %v489 = vlaneseq
          %v490 = vshrl.u32 %v489, 7
          %v491 = vsub.s32 %v488, %v490
          %v492 = vrot.slane %v485, %v491
          %v494 = vadd.f32 %v295, %v492
          %vm495 = vcmask 122880
          %496 = vst.msk [vmem:[#allocation2] sm:$0x1] %vm495, %v494
        $region52: #{tpu_custom_call.1} parent=39 // pred_fallthru
          _
        // Predicated region
        $region53: #{tpu_custom_call.1} parent=39 // pred_check
          %p497 = pneg %p269
        $region54: #{tpu_custom_call.1} parent=39 // pred_check_branch
          %499 = sbr.rel (%p497) target = $region56
        $region55: #{tpu_custom_call.1} parent=39 // pred_region
          %v500 = vld [vmem:[#allocation2] sm:$0x1]
          %v501 = vmul.f32 %v500, 0.00390625
          %v502 = vld [vmem:[%s1] sm:$0xff]
          %v503 = vld [vmem:[%s1 + $0x8] sm:$0xff]
          %vm504 = vcmask 130048
          %v506 = vsel %vm504, %v501, 0
          %508 = vmatprep.subr.mxu0 0.0
          %509 = vmatpush1.msra.mxu0 %v502
          %510 = vmatprep.subr.mxu0 0.0
          %511 = vmatpush1.msra.mxu0 %v503
          %512 = vmatprep.subr.mxu0 0.0
          %513 = vmatpush1.msra.mxu0 0.0
          %514 = vmatprep.subr.mxu0 0.0
          %515 = vmatpush1.msra.mxu0 0.0
          %516 = vmatprep.subr.mxu0 0.0
          %517 = vmatpush1.msra.mxu0 0.0
          %518 = vmatprep.subr.mxu0 0.0
          %519 = vmatpush1.msra.mxu0 0.0
          %520 = vmatprep.subr.mxu0 0.0
          %521 = vmatpush1.msra.mxu0 0.0
          %522 = vmatprep.subr.mxu0 0.0
          %523 = vmatpush1.msra.mxu0 0.0
          %524 = vmatprep.subr.mxu0 0.0
          %525 = vmatpush1.msra.mxu0 0.0
          %526 = vmatprep.subr.mxu0 0.0
          %527 = vmatpush1.msra.mxu0 0.0
          %528 = vmatprep.subr.mxu0 0.0
          %529 = vmatpush1.msra.mxu0 0.0
          %530 = vmatprep.subr.mxu0 0.0
          %531 = vmatpush1.msra.mxu0 0.0
          %532 = vmatprep.subr.mxu0 0.0
          %533 = vmatpush1.msra.mxu0 0.0
          %534 = vmatprep.subr.mxu0 0.0
          %535 = vmatpush1.msra.mxu0 0.0
          %536 = vmatprep.subr.mxu0 0.0
          %537 = vmatpush1.msra.mxu0 0.0
          %538 = vmatprep.subr.mxu0 0.0
          %539 = vmatpush1.msra.mxu0 0.0
          %540 = vmatprep.subr.mxu0 0.0
          %541 = vmatpush1.msra.mxu0 0.0
          %542 = vmatprep.subr.mxu0 0.0
          %543 = vmatpush1.msra.mxu0 0.0
          %544 = vmatprep.subr.mxu0 0.0
          %545 = vmatpush1.msra.mxu0 0.0
          %546 = vmatprep.subr.mxu0 0.0
          %547 = vmatpush1.msra.mxu0 0.0
          %548 = vmatprep.subr.mxu0 0.0
          %549 = vmatpush1.msra.mxu0 0.0
          %550 = vmatprep.subr.mxu0 0.0
          %551 = vmatpush1.msra.mxu0 0.0
          %552 = vmatprep.subr.mxu0 0.0
          %553 = vmatpush1.msra.mxu0 0.0
          %554 = vmatprep.subr.mxu0 0.0
          %555 = vmatpush1.msra.mxu0 0.0
          %556 = vmatprep.subr.mxu0 0.0
          %557 = vmatpush1.msra.mxu0 0.0
          %558 = vmatprep.subr.mxu0 0.0
          %559 = vmatpush1.msra.mxu0 0.0
          %560 = vmatprep.subr.mxu0 0.0
          %561 = vmatpush1.msra.mxu0 0.0
          %562 = vmatprep.subr.mxu0 0.0
          %563 = vmatpush1.msra.mxu0 0.0
          %564 = vmatprep.subr.mxu0 0.0
          %565 = vmatpush1.msra.mxu0 0.0
          %566 = vmatprep.subr.mxu0 0.0
          %567 = vmatpush1.msra.mxu0 0.0
          %568 = vmatprep.subr.mxu0 0.0
          %569 = vmatpush1.msra.mxu0 0.0
          %570 = vmatprep.subr.mxu0 0.0
          %571 = vmatpush1.msra.mxu0 0.0
          %572 = vmatprep.mubr.f32.mxu0 0.0
          %573 = vmatmul.mubr.f32.gmra.mrb[0].mxu0 %v506
          %v574 = vpop.f32.mrb[0].mxu0
          %v575 = vadd.f32 0.0, %v574
          %v576 = vpop.f32.mrb[0].mxu0
          %577 = vdwg.mxu0
          %v578 = vmax.f32 %v575, 0.0
          %v579 = vld [vmem:[%s2] sm:$0xf]
          %vm580 = vcmask 31744
          %v582 = vsel %vm580, %v578, 0
          %vm584 = vcmask 1043456
          %v586 = vsel %vm584, %v579, 0
          %588 = vmatprep.subr.mxu0 0.0
          %589 = vmatpush1.msra.mxu0 %v586
          %590 = vmatprep.subr.mxu0 0.0
          %591 = vmatpush1.msra.mxu0 0.0
          %592 = vmatprep.subr.mxu0 0.0
          %593 = vmatpush1.msra.mxu0 0.0
          %594 = vmatprep.subr.mxu0 0.0
          %595 = vmatpush1.msra.mxu0 0.0
          %596 = vmatprep.subr.mxu0 0.0
          %597 = vmatpush1.msra.mxu0 0.0
          %598 = vmatprep.subr.mxu0 0.0
          %599 = vmatpush1.msra.mxu0 0.0
          %600 = vmatprep.subr.mxu0 0.0
          %601 = vmatpush1.msra.mxu0 0.0
          %602 = vmatprep.subr.mxu0 0.0
          %603 = vmatpush1.msra.mxu0 0.0
          %604 = vmatprep.subr.mxu0 0.0
          %605 = vmatpush1.msra.mxu0 0.0
          %606 = vmatprep.subr.mxu0 0.0
          %607 = vmatpush1.msra.mxu0 0.0
          %608 = vmatprep.subr.mxu0 0.0
          %609 = vmatpush1.msra.mxu0 0.0
          %610 = vmatprep.subr.mxu0 0.0
          %611 = vmatpush1.msra.mxu0 0.0
          %612 = vmatprep.subr.mxu0 0.0
          %613 = vmatpush1.msra.mxu0 0.0
          %614 = vmatprep.subr.mxu0 0.0
          %615 = vmatpush1.msra.mxu0 0.0
          %616 = vmatprep.subr.mxu0 0.0
          %617 = vmatpush1.msra.mxu0 0.0
          %618 = vmatprep.subr.mxu0 0.0
          %619 = vmatpush1.msra.mxu0 0.0
          %620 = vmatprep.subr.mxu0 0.0
          %621 = vmatpush1.msra.mxu0 0.0
          %622 = vmatprep.subr.mxu0 0.0
          %623 = vmatpush1.msra.mxu0 0.0
          %624 = vmatprep.subr.mxu0 0.0
          %625 = vmatpush1.msra.mxu0 0.0
          %626 = vmatprep.subr.mxu0 0.0
          %627 = vmatpush1.msra.mxu0 0.0
          %628 = vmatprep.subr.mxu0 0.0
          %629 = vmatpush1.msra.mxu0 0.0
          %630 = vmatprep.subr.mxu0 0.0
          %631 = vmatpush1.msra.mxu0 0.0
          %632 = vmatprep.subr.mxu0 0.0
          %633 = vmatpush1.msra.mxu0 0.0
          %634 = vmatprep.subr.mxu0 0.0
          %635 = vmatpush1.msra.mxu0 0.0
          %636 = vmatprep.subr.mxu0 0.0
          %637 = vmatpush1.msra.mxu0 0.0
          %638 = vmatprep.subr.mxu0 0.0
          %639 = vmatpush1.msra.mxu0 0.0
          %640 = vmatprep.subr.mxu0 0.0
          %641 = vmatpush1.msra.mxu0 0.0
          %642 = vmatprep.subr.mxu0 0.0
          %643 = vmatpush1.msra.mxu0 0.0
          %644 = vmatprep.subr.mxu0 0.0
          %645 = vmatpush1.msra.mxu0 0.0
          %646 = vmatprep.subr.mxu0 0.0
          %647 = vmatpush1.msra.mxu0 0.0
          %648 = vmatprep.subr.mxu0 0.0
          %649 = vmatpush1.msra.mxu0 0.0
          %650 = vmatprep.subr.mxu0 0.0
          %651 = vmatpush1.msra.mxu0 0.0
          %652 = vmatprep.mubr.f32.mxu0 0.0
          %653 = vmatmul.mubr.f32.gmra.mrb[0].mxu0 %v582
          %v654 = vpop.f32.mrb[0].mxu0
          %v655 = vadd.f32 0.0, %v654
          %v656 = vpop.f32.mrb[0].mxu0
          %657 = vdwg.mxu0
          %v658 = vxor.u32 %v655, 2147483648
          %v659 = vmul.f32 %v658, 1.442695
          %v660 = vpow.pop %v659
          %v661 = vadd.f32 %v660, 1.0
          %v662 = vrcp.pop %v661
          %v663 = vmul.f32 1.0, %v662
          %v664 = vmul.f32 %v501, %v663
          %v665 = vld [vmem:[%s3] sm:$0xff]
          %v666 = vld [vmem:[%s3 + $0x8] sm:$0xff]
          %v667 = vld [vmem:[%s4] sm:$0x1]
          %v669 = vsel %vm504, %v664, 0
          %671 = vmatprep.subr.mxu0 0.0
          %672 = vmatpush1.msra.mxu0 %v665
          %673 = vmatprep.subr.mxu0 0.0
          %674 = vmatpush1.msra.mxu0 %v666
          %675 = vmatprep.subr.mxu0 0.0
          %676 = vmatpush1.msra.mxu0 0.0
          %677 = vmatprep.subr.mxu0 0.0
          %678 = vmatpush1.msra.mxu0 0.0
          %679 = vmatprep.subr.mxu0 0.0
          %680 = vmatpush1.msra.mxu0 0.0
          %681 = vmatprep.subr.mxu0 0.0
          %682 = vmatpush1.msra.mxu0 0.0
          %683 = vmatprep.subr.mxu0 0.0
          %684 = vmatpush1.msra.mxu0 0.0
          %685 = vmatprep.subr.mxu0 0.0
          %686 = vmatpush1.msra.mxu0 0.0
          %687 = vmatprep.subr.mxu0 0.0
          %688 = vmatpush1.msra.mxu0 0.0
          %689 = vmatprep.subr.mxu0 0.0
          %690 = vmatpush1.msra.mxu0 0.0
          %691 = vmatprep.subr.mxu0 0.0
          %692 = vmatpush1.msra.mxu0 0.0
          %693 = vmatprep.subr.mxu0 0.0
          %694 = vmatpush1.msra.mxu0 0.0
          %695 = vmatprep.subr.mxu0 0.0
          %696 = vmatpush1.msra.mxu0 0.0
          %697 = vmatprep.subr.mxu0 0.0
          %698 = vmatpush1.msra.mxu0 0.0
          %699 = vmatprep.subr.mxu0 0.0
          %700 = vmatpush1.msra.mxu0 0.0
          %701 = vmatprep.subr.mxu0 0.0
          %702 = vmatpush1.msra.mxu0 0.0
          %703 = vmatprep.subr.mxu0 0.0
          %704 = vmatpush1.msra.mxu0 0.0
          %705 = vmatprep.subr.mxu0 0.0
          %706 = vmatpush1.msra.mxu0 0.0
          %707 = vmatprep.subr.mxu0 0.0
          %708 = vmatpush1.msra.mxu0 0.0
          %709 = vmatprep.subr.mxu0 0.0
          %710 = vmatpush1.msra.mxu0 0.0
          %711 = vmatprep.subr.mxu0 0.0
          %712 = vmatpush1.msra.mxu0 0.0
          %713 = vmatprep.subr.mxu0 0.0
          %714 = vmatpush1.msra.mxu0 0.0
          %715 = vmatprep.subr.mxu0 0.0
          %716 = vmatpush1.msra.mxu0 0.0
          %717 = vmatprep.subr.mxu0 0.0
          %718 = vmatpush1.msra.mxu0 0.0
          %719 = vmatprep.subr.mxu0 0.0
          %720 = vmatpush1.msra.mxu0 0.0
          %721 = vmatprep.subr.mxu0 0.0
          %722 = vmatpush1.msra.mxu0 0.0
          %723 = vmatprep.subr.mxu0 0.0
          %724 = vmatpush1.msra.mxu0 0.0
          %725 = vmatprep.subr.mxu0 0.0
          %726 = vmatpush1.msra.mxu0 0.0
          %727 = vmatprep.subr.mxu0 0.0
          %728 = vmatpush1.msra.mxu0 0.0
          %729 = vmatprep.subr.mxu0 0.0
          %730 = vmatpush1.msra.mxu0 0.0
          %731 = vmatprep.subr.mxu0 0.0
          %732 = vmatpush1.msra.mxu0 0.0
          %733 = vmatprep.subr.mxu0 0.0
          %734 = vmatpush1.msra.mxu0 0.0
          %735 = vmatprep.mubr.f32.mxu0 0.0
          %736 = vmatmul.mubr.f32.gmra.mrb[0].mxu0 %v669
          %v737 = vpop.f32.mrb[0].mxu0
          %v738 = vadd.f32 %v667, %v737
          %v739 = vpop.f32.mrb[0].mxu0
          %740 = vdwg.mxu0
          %741 = vst [vmem:[%s257] sm:$0x1] %v738
        $region56: #{tpu_custom_call.1} parent=39 // pred_fallthru
          _
        %s742 = sand.u32 %s154, 1
        %s743 = scalar_lea.sflag [#allocation5], %s742
        %s744 = sand.u32 %s154, 1
        %s745 = scalar_lea.vmem [#allocation6], %s744
        // Predicated region
        $region57: #{tpu_custom_call.1} parent=39 // pred_check
          %p746 = pneg %p164
        $region58: #{tpu_custom_call.1} parent=39 // pred_check_branch
          %748 = sbr.rel (%p746) target = $region60
        $region59: #{tpu_custom_call.1} parent=39 // pred_region
          %s750 = ssub.s32 16, 16
          %751 = vsyncadd %s743, %s750
          %s752 = smul.addr %s26, 16
          %s753 = scalar_lea.hbm %s5, %s752
          %s755 = sshll.u32 %s745, 4
          %s756 = int_to_ptr.vmem [resolvable:$true] %s755
          %758 = dma.vmem_to_hbm [thread:$0]  %s756, 16, %s753, %s743
        $region60: #{tpu_custom_call.1} parent=39 // pred_fallthru
          _
      $region40: #{tpu_custom_call.1} parent=5 // pred_fallthru
        _
      %p759 = scmp.le.s32.totalorder 2, %s17
      // Predicated region
      $region61: #{tpu_custom_call.1} parent=5 // pred_check
        %p760 = pneg %p759
      $region62: #{tpu_custom_call.1} parent=5 // pred_check_branch
        %762 = sbr.rel (%p760) target = $region64
      $region63: #{tpu_custom_call.1} parent=5 // pred_region
        %s763 = ssub.s32 %s17, 2
        // Predicated region
        $region65: #{tpu_custom_call.1} parent=63 // pred_check
          %p764 = pneg %p170
        $region66: #{tpu_custom_call.1} parent=63 // pred_check_branch
          %766 = sbr.rel (%p764) target = $region68
        $region67: #{tpu_custom_call.1} parent=63 // pred_region
          %s767 = sand.u32 %s155, 1
          %s768 = scalar_lea.sflag [#allocation5], %s767
          %s769 = sand.u32 %s155, 1
          %s770 = scalar_lea.vmem [#allocation6], %s769
          %771 = dma.done %s768, 16
        $region68: #{tpu_custom_call.1} parent=63 // pred_fallthru
          _
      $region64: #{tpu_custom_call.1} parent=5 // pred_fallthru
        _
    $region6: #{tpu_custom_call.1} parent=1 // loop_footer
      %s21 = sadd.s32 1, %s17
    $region7: #{tpu_custom_call.1} parent=1 // loop_footer_branch
      %16 = sbr.rel target = $region3
    $region8: #{tpu_custom_call.1} parent=1 // loop_exit
      _
    %772 = vsyncpa [#allocation4], 1
    %s773 = scalar_lea.sflag [#allocation4], 1
    %774 = vsyncpa %s773, 1
    %775 = vsyncpa [#allocation5], 1
    %s776 = scalar_lea.sflag [#allocation5], 1
    %777 = vsyncpa %s776, 1

</llo_original>
